<compile_context>
chip_gen: v7x
topology: tpu7x:2x2x1
jax: 0.10.0
libtpu: 0.0.40
codegen_flags: <defaults>
</compile_context>

<pallas_src>
import jax
import jax.numpy as jnp
from jax.experimental import pallas as pl
from jax.experimental.pallas import tpu as pltpu


def _time_conv_transr_kernel(x_ref, a_ref, bconv_ref, wfc_ref, bfc_ref, rel_ref, out_ref):
    # tanh of the gathered+concatenated [e1 | e2] rows. bn0 is already folded into
    # a_ref / bconv_ref, so nothing but tanh (EUP) runs ahead of the MXU.
    e = jnp.tanh(x_ref[...].astype(jnp.float32))

    # Conv1d(2->C, k=3, pad=1) with bn0+bn1 folded in, as ONE banded MXU matmul (K = 2D)
    # that directly produces PyTorch's flatten order (feature = c*D + d), lane-dense.
    z = jnp.dot(e.astype(a_ref.dtype), a_ref[...], preferred_element_type=jnp.float32)
    h = jnp.maximum(z + bconv_ref[...], 0.0)              # (TB, C*D)  == relu(x).view(B, -1)

    # fc (bn2 folded): single K = C*D MXU contraction, then bias + ReLU
    x = jnp.dot(h.astype(wfc_ref.dtype), wfc_ref[...], preferred_element_type=jnp.float32)
    x = jnp.maximum(x + bfc_ref[...], 0.0)                # (TB, D)

    # score against all relations (relation dim zero-padded to a multiple of 128)
    out_ref[...] = jnp.dot(x.astype(rel_ref.dtype), rel_ref[...],
                           preferred_element_type=jnp.float32).astype(out_ref.dtype)


def time_conv_transr_forward(embedding, emb_rel, triplets, params, *,
                             tb=None, mxu_dtype=jnp.bfloat16, vmem_limit_bytes=None):
    """Pallas forward for TimeConvTransR (eval-mode BN, dropout p=0, partial_embeding=None).

    tb: batch tile (rows per grid step). None -> auto (256 if B >= 512 else 128) so the
        "parallel" grid keeps >= 2 steps (both v7x TCs) while filling the MXU M rows.
    mxu_dtype: dtype of the matmul operands (bf16 recommended; accumulation stays f32).
    """
    eps = 1e-5
    D = embedding.shape[1]
    C = params["conv_w"].shape[0]
    CD = C * D
    num_rel2 = emb_rel.shape[0]
    B = triplets.shape[0]

    if tb is None:
        tb = 256 if B >= 512 else 128

    # ---- glue: gather rows, concat to (B, 2D), pad batch to a tile multiple ----
    x_cat = jnp.concatenate(
        [embedding[triplets[:, 0]], embedding[triplets[:, 2]]], axis=1
    ).astype(jnp.float32)                                              # (B, 2D)
    b_pad = pl.cdiv(B, tb) * tb
    if b_pad != B:
        x_cat = jnp.pad(x_cat, ((0, b_pad - B), (0, 0)))

    # ---- fold BN affines (eval mode) into the adjacent weights ----
    s0 = params["bn0_gamma"] / jnp.sqrt(params["bn0_var"] + eps)       # (2,)
    t0 = params["bn0_beta"] - params["bn0_mean"] * s0
    s1 = params["bn1_gamma"] / jnp.sqrt(params["bn1_var"] + eps)       # (C,)
    t1 = params["bn1_beta"] - params["bn1_mean"] * s1
    w_f = params["conv_w"] * s1[:, None, None]                         # (C, 2, 3) bn1-folded

    # Banded conv matrices A[t][d_in, c*D + d_out] = w_f[c, t, d_in - d_out + 1] for
    # |d_in - d_out| <= 1, zero elsewhere (encodes the k=3 / pad=1 conv exactly).
    d_in = jnp.arange(D)[:, None]
    d_out = jnp.arange(D)[None, :]
    offset = d_in - d_out + 1                                          # kernel tap index
    valid = (offset >= 0) & (offset <= 2)
    offs_c = jnp.clip(offset, 0, 2)
    band = jnp.where(valid[None, None, :, :], w_f[:, :, offs_c], 0.0)  # (C, 2, D, D)
    A = band.transpose(1, 2, 0, 3).reshape(2, D, CD)                   # (2, D, C*D)

    # bn0 fold: scale each band by its channel's s0; push the shift t0 through the
    # (unscaled) band into the conv bias. Exact: the band encodes the zero padding,
    # so pad positions correctly contribute nothing.
    bias_from_t0 = t0[0] * jnp.sum(A[0], axis=0) + t0[1] * jnp.sum(A[1], axis=0)     # (CD,)
    A_fused = jnp.concatenate([A[0] * s0[0], A[1] * s0[1]], axis=0).astype(mxu_dtype)  # (2D, CD)
    bconv = (jnp.broadcast_to((params["conv_b"] * s1 + t1)[:, None], (C, D)).reshape(CD)
             + bias_from_t0).reshape(1, CD).astype(jnp.float32)

    s2 = params["bn2_gamma"] / jnp.sqrt(params["bn2_var"] + eps)       # (D,)
    t2 = params["bn2_beta"] - params["bn2_mean"] * s2
    wfc2 = (params["fc_w"] * s2[:, None]).T.astype(mxu_dtype)          # (C*D, D) bn2-folded
    bfc2 = (params["fc_b"] * s2 + t2).reshape(1, D).astype(jnp.float32)

    # ---- pad the relation dim to a multiple of 128 (lane-dense matmul + stores) ----
    nr_pad = pl.cdiv(num_rel2, 128) * 128
    rel_t = jnp.pad(emb_rel.T.astype(mxu_dtype), ((0, 0), (0, nr_pad - num_rel2)))

    # bf16 scores on the bf16 path halve the (mostly-padding) output writeback bytes.
    out_dtype = jnp.float32 if mxu_dtype == jnp.float32 else jnp.bfloat16

    out = pl.pallas_call(
        _time_conv_transr_kernel,
        out_shape=jax.ShapeDtypeStruct((b_pad, nr_pad), out_dtype),
        grid_spec=pltpu.PrefetchScalarGridSpec(
            num_scalar_prefetch=0,
            grid=(b_pad // tb,),
            in_specs=[
                pl.BlockSpec((tb, 2 * D), lambda i: (i, 0)),     # [e1 | e2] rows (pre-tanh)
                pl.BlockSpec((2 * D, CD), lambda i: (0, 0)),     # fused banded conv (bn0+bn1)
                pl.BlockSpec((1, CD), lambda i: (0, 0)),         # conv bias (bn0/bn1 folded)
                pl.BlockSpec((CD, D), lambda i: (0, 0)),         # fc weights (bn2 folded)
                pl.BlockSpec((1, D), lambda i: (0, 0)),          # fc bias (bn2 folded)
                pl.BlockSpec((D, nr_pad), lambda i: (0, 0)),     # emb_rel^T (padded)
            ],
            out_specs=pl.BlockSpec((tb, nr_pad), lambda i: (i, 0)),
        ),
        compiler_params=pltpu.CompilerParams(
            dimension_semantics=("parallel",),
            vmem_limit_bytes=vmem_limit_bytes),
    )(x_cat, A_fused, bconv, wfc2, bfc2, rel_t)

    return out[:B, :num_rel2]


def reference_forward(embedding, emb_rel, triplets, params):
    """Pure-JAX reference mirroring the PyTorch forward (eval-mode BN, dropout p=0)."""
    eps = 1e-5
    hp = jax.lax.Precision.HIGHEST
    e_all = jnp.tanh(embedding)
    e1 = e_all[triplets[:, 0]][:, None, :]
    e2 = e_all[triplets[:, 2]][:, None, :]
    x = jnp.concatenate([e1, e2], axis=1)                              # (B, 2, D)
    x = ((x - params["bn0_mean"][None, :, None])
         / jnp.sqrt(params["bn0_var"][None, :, None] + eps)
         * params["bn0_gamma"][None, :, None]
         + params["bn0_beta"][None, :, None])
    y = jax.lax.conv_general_dilated(
        x, params["conv_w"], window_strides=(1,), padding=[(1, 1)],
        dimension_numbers=("NCH", "OIH", "NCH"), precision=hp)
    y = y + params["conv_b"][None, :, None]
    y = ((y - params["bn1_mean"][None, :, None])
         / jnp.sqrt(params["bn1_var"][None, :, None] + eps)
         * params["bn1_gamma"][None, :, None]
         + params["bn1_beta"][None, :, None])
    y = jnp.maximum(y, 0.0)
    B = y.shape[0]
    z = jnp.dot(y.reshape(B, -1), params["fc_w"].T, precision=hp) + params["fc_b"]
    z = ((z - params["bn2_mean"]) / jnp.sqrt(params["bn2_var"] + eps)
         * params["bn2_gamma"] + params["bn2_beta"])
    z = jnp.maximum(z, 0.0)
    return jnp.dot(z, emb_rel.T, precision=hp)


def init_params(key, embedding_dim, channels=8, kernel_size=3):
    D, C, K = embedding_dim, channels, kernel_size
    ks = jax.random.split(key, 16)
    p = {}
    p["conv_w"] = 0.3 * jax.random.normal(ks[0], (C, 2, K), jnp.float32)
    p["conv_b"] = 0.1 * jax.random.normal(ks[1], (C,), jnp.float32)
    p["fc_w"] = 0.05 * jax.random.normal(ks[2], (D, C * D), jnp.float32)
    p["fc_b"] = 0.1 * jax.random.normal(ks[3], (D,), jnp.float32)

    def bn(kg, kb, km, kv, n):
        return (jax.random.uniform(kg, (n,), jnp.float32, 0.5, 1.5),
                0.1 * jax.random.normal(kb, (n,), jnp.float32),
                0.1 * jax.random.normal(km, (n,), jnp.float32),
                jax.random.uniform(kv, (n,), jnp.float32, 0.5, 1.5))

    p["bn0_gamma"], p["bn0_beta"], p["bn0_mean"], p["bn0_var"] = bn(ks[4], ks[5], ks[6], ks[7], 2)
    p["bn1_gamma"], p["bn1_beta"], p["bn1_mean"], p["bn1_var"] = bn(ks[8], ks[9], ks[10], ks[11], C)
    p["bn2_gamma"], p["bn2_beta"], p["bn2_mean"], p["bn2_var"] = bn(ks[12], ks[13], ks[14], ks[15], D)
    # Note: the 'b' Parameter (zeros(num_relations*2)) of the PyTorch module is unused in forward.
    return p


if __name__ == "__main__":
    num_relations = 10
    D = 32            # embedding_dim
    C = 8             # conv channels (constructor arg; default 50, small here)
    num_nodes = 64
    B = 200           # number of triplets (not a tile multiple -> exercises batch padding)

    key = jax.random.PRNGKey(0)
    kp, ke, kr, kt1, ks_, ko_, krel = jax.random.split(key, 7)
    params = init_params(kp, D, channels=C, kernel_size=3)

    embedding = jax.random.normal(ke, (num_nodes, D), jnp.float32)
    emb_rel = jax.random.normal(kr, (2 * num_relations, D), jnp.float32)
    emb_time = jax.random.normal(kt1, (8, D), jnp.float32)   # unused by forward (signature parity)
    subj = jax.random.randint(ks_, (B,), 0, num_nodes)
    obj = jax.random.randint(ko_, (B,), 0, num_nodes)
    rel = jax.random.randint(krel, (B,), 0, 2 * num_relations)
    triplets = jnp.stack([subj, rel, obj], axis=1)           # (B, 3) int32

    ref = reference_forward(embedding, emb_rel, triplets, params)

    # f32 MXU operand path: tight correctness check (tb auto -> 128 -> 2 parallel grid steps).
    out_f32 = time_conv_transr_forward(embedding, emb_rel, triplets, params,
                                       mxu_dtype=jnp.float32)
    out_f32 = jax.block_until_ready(out_f32)
    assert out_f32.shape == (B, 2 * num_relations)
    d32 = float(jnp.max(jnp.abs(out_f32 - ref)))
    assert bool(jnp.allclose(out_f32, ref, atol=1e-2, rtol=1e-2)), f"f32 max abs diff {d32}"

    # Default bf16 MXU operand path (perf configuration): looser tolerance for bf16 rounding.
    out_bf16 = time_conv_transr_forward(embedding, emb_rel, triplets, params)
    out_bf16 = jax.block_until_ready(out_bf16).astype(jnp.float32)
    assert out_bf16.shape == (B, 2 * num_relations)
    d16 = float(jnp.max(jnp.abs(out_bf16 - ref)))
    assert bool(jnp.allclose(out_bf16, ref, atol=1.5e-1, rtol=5e-2)), f"bf16 max abs diff {d16}"

    print("KERNEL_OK")
</pallas_src>

<mosaic_0001>
module attributes {stable_mosaic.version = 11 : i64} {
  func.func @_time_conv_transr_kernel(%arg0: i32, %arg1: memref<128x64xf32, #tpu.memory_space<vmem>>, %arg2: memref<64x256xf32, #tpu.memory_space<vmem>>, %arg3: memref<1x256xf32, #tpu.memory_space<vmem>>, %arg4: memref<256x32xf32, #tpu.memory_space<vmem>>, %arg5: memref<1x32xf32, #tpu.memory_space<vmem>>, %arg6: memref<32x128xf32, #tpu.memory_space<vmem>>, %arg7: memref<128x128xf32, #tpu.memory_space<vmem>>) attributes {dimension_semantics = [#tpu.dimension_semantics<parallel>], iteration_bounds = array<i64: 2>, scalar_prefetch = 0 : i64, scratch_operands = 0 : i64, tpu.core_type = #tpu.core_type<tc>, window_params = [{transform_indices = @transform_0, window_bounds = array<i64: 128, 64>}, {pipeline_mode = #tpu.pipeline_mode<synchronous>, transform_indices = @transform_1, window_bounds = array<i64: 64, 256>}, {pipeline_mode = #tpu.pipeline_mode<synchronous>, transform_indices = @transform_2, window_bounds = array<i64: 1, 256>}, {pipeline_mode = #tpu.pipeline_mode<synchronous>, transform_indices = @transform_3, window_bounds = array<i64: 256, 32>}, {pipeline_mode = #tpu.pipeline_mode<synchronous>, transform_indices = @transform_4, window_bounds = array<i64: 1, 32>}, {pipeline_mode = #tpu.pipeline_mode<synchronous>, transform_indices = @transform_5, window_bounds = array<i64: 32, 128>}, {transform_indices = @transform_6, window_bounds = array<i64: 128, 128>}]} {
    %c0 = arith.constant 0 : index
    %c0_0 = arith.constant 0 : index
    %0 = vector.load %arg1[%c0, %c0_0] : memref<128x64xf32, #tpu.memory_space<vmem>>, vector<128x64xf32>
    %1 = math.tanh %0 : vector<128x64xf32>
    %c0_1 = arith.constant 0 : index
    %c0_2 = arith.constant 0 : index
    %2 = vector.load %arg2[%c0_1, %c0_2] : memref<64x256xf32, #tpu.memory_space<vmem>>, vector<64x256xf32>
    %cst = arith.constant dense<0.000000e+00> : vector<128x256xf32>
    %3 = tpu.matmul %1, %2, %cst {dimension_numbers = #tpu.dot_dimension_numbers<[1], [0], [0], [1], [0, 0, 1, 1], [], []>} : vector<128x64xf32>, vector<64x256xf32>, vector<128x256xf32> -> vector<128x256xf32>
    %c0_3 = arith.constant 0 : index
    %c0_4 = arith.constant 0 : index
    %4 = vector.load %arg3[%c0_3, %c0_4] : memref<1x256xf32, #tpu.memory_space<vmem>>, vector<1x256xf32>
    %5 = vector.broadcast %4 : vector<1x256xf32> to vector<128x256xf32>
    %6 = arith.addf %3, %5 : vector<128x256xf32>
    %cst_5 = arith.constant 0.000000e+00 : f32
    %7 = vector.broadcast %cst_5 : f32 to vector<128x256xf32>
    %8 = arith.maximumf %6, %7 : vector<128x256xf32>
    %c0_6 = arith.constant 0 : index
    %c0_7 = arith.constant 0 : index
    %9 = vector.load %arg4[%c0_6, %c0_7] : memref<256x32xf32, #tpu.memory_space<vmem>>, vector<256x32xf32>
    %cst_8 = arith.constant dense<0.000000e+00> : vector<128x32xf32>
    %10 = tpu.matmul %8, %9, %cst_8 {dimension_numbers = #tpu.dot_dimension_numbers<[1], [0], [0], [1], [0, 0, 1, 1], [], []>} : vector<128x256xf32>, vector<256x32xf32>, vector<128x32xf32> -> vector<128x32xf32>
    %c0_9 = arith.constant 0 : index
    %c0_10 = arith.constant 0 : index
    %11 = vector.load %arg5[%c0_9, %c0_10] : memref<1x32xf32, #tpu.memory_space<vmem>>, vector<1x32xf32>
    %12 = vector.broadcast %11 : vector<1x32xf32> to vector<128x32xf32>
    %13 = arith.addf %10, %12 : vector<128x32xf32>
    %cst_11 = arith.constant 0.000000e+00 : f32
    %14 = vector.broadcast %cst_11 : f32 to vector<128x32xf32>
    %15 = arith.maximumf %13, %14 : vector<128x32xf32>
    %c0_12 = arith.constant 0 : index
    %c0_13 = arith.constant 0 : index
    %16 = vector.load %arg6[%c0_12, %c0_13] : memref<32x128xf32, #tpu.memory_space<vmem>>, vector<32x128xf32>
    %cst_14 = arith.constant dense<0.000000e+00> : vector<128x128xf32>
    %17 = tpu.matmul %15, %16, %cst_14 {dimension_numbers = #tpu.dot_dimension_numbers<[1], [0], [0], [1], [0, 0, 1, 1], [], []>} : vector<128x32xf32>, vector<32x128xf32>, vector<128x128xf32> -> vector<128x128xf32>
    %c0_15 = arith.constant 0 : index
    %c0_16 = arith.constant 0 : index
    %18 = vector.load %arg7[%c0_15, %c0_16] : memref<128x128xf32, #tpu.memory_space<vmem>>, vector<128x128xf32>
    tpu.vector_store %arg7[%c0_15, %c0_16], %17 {strides = array<i32>} : memref<128x128xf32, #tpu.memory_space<vmem>>, vector<128x128xf32>,
    return
  }
  func.func @transform_0(%arg0: i32) -> (i32, i32) {
    %c0_i32 = arith.constant 0 : i32
    %c0_i32_0 = arith.constant 0 : i32
    return %arg0, %c0_i32 : i32, i32
  }
  func.func @transform_1(%arg0: i32) -> (i32, i32) {
    %c0_i32 = arith.constant 0 : i32
    %c0_i32_0 = arith.constant 0 : i32
    %c0_i32_1 = arith.constant 0 : i32
    return %c0_i32, %c0_i32_0 : i32, i32
  }
  func.func @transform_2(%arg0: i32) -> (i32, i32) {
    %c0_i32 = arith.constant 0 : i32
    %c0_i32_0 = arith.constant 0 : i32
    %c0_i32_1 = arith.constant 0 : i32
    return %c0_i32, %c0_i32_0 : i32, i32
  }
  func.func @transform_3(%arg0: i32) -> (i32, i32) {
    %c0_i32 = arith.constant 0 : i32
    %c0_i32_0 = arith.constant 0 : i32
    %c0_i32_1 = arith.constant 0 : i32
    return %c0_i32, %c0_i32_0 : i32, i32
  }
  func.func @transform_4(%arg0: i32) -> (i32, i32) {
    %c0_i32 = arith.constant 0 : i32
    %c0_i32_0 = arith.constant 0 : i32
    %c0_i32_1 = arith.constant 0 : i32
    return %c0_i32, %c0_i32_0 : i32, i32
  }
  func.func @transform_5(%arg0: i32) -> (i32, i32) {
    %c0_i32 = arith.constant 0 : i32
    %c0_i32_0 = arith.constant 0 : i32
    %c0_i32_1 = arith.constant 0 : i32
    return %c0_i32, %c0_i32_0 : i32, i32
  }
  func.func @transform_6(%arg0: i32) -> (i32, i32) {
    %c0_i32 = arith.constant 0 : i32
    %c0_i32_0 = arith.constant 0 : i32
    return %arg0, %c0_i32 : i32, i32
  }
}

</mosaic_0001>

<llo_original>
// kernel: tpu_custom_call.1
$region0: #{tpu_custom_call.1}
  #allocation0 [shape = 'u32[]', space=smem, size = 0x4, offset = 0x4, fixed_abs, tag = 'smem constant byte address 0x4 - core index']
  #allocation1 [shape = 'u32[144,128]{1,0:T(1,128)}', space=vmem, size = 0x12000, scoped, tag = 'internal scratch']
  %s0 = inlined_call_operand.vmem [shape: f32[256,64], index: 0, kind: input, shape index: {}]
  %s1 = inlined_call_operand.vmem [shape: f32[64,256], index: 1, kind: input, shape index: {}]
  %s2 = inlined_call_operand.vmem [shape: f32[1,256], index: 2, kind: input, shape index: {}]
  %s3 = inlined_call_operand.vmem [shape: f32[256,32], index: 3, kind: input, shape index: {}]
  %s4 = inlined_call_operand.vmem [shape: f32[1,32], index: 4, kind: input, shape index: {}]
  %s5 = inlined_call_operand.vmem [shape: f32[32,128], index: 5, kind: input, shape index: {}]
  %s6 = inlined_call_operand.hbm [shape: f32[256,128], index: 6, kind: output, shape index: {}]
  %s7 = sld [smem:[#allocation0]]
  $region57: #{tpu_custom_call.1} parent=0
    _
  %s9 = ssub.s32 1, %s7
  %s10 = scalar_select 0, %s9, %s7
  $region1: #{tpu_custom_call.1} parent=0
    #allocation2 [shape = 'u8[131072]{0}', space=vmem, size = 0x20000, scoped, tag = 'output window, operand 0']
    #allocation3 [shape = 's32[2]{0}', space=sflag, size = 0x8, scoped, tag = 'scoped memory for tpu_custom_call.1']
    %11 = vsyncpa [#allocation3], 0
    %s12 = scalar_lea.sflag [#allocation3], 1
    %13 = vsyncpa %s12, 0
    loop: start=0, step=1, limit=4
    $region2: #{tpu_custom_call.1} parent=1 // loop_pre_header
      _
    $region3: #{tpu_custom_call.1} parent=1 // loop_header
      %s15 = sphi 0, %s19
      %p16 = scmp.ge.s32.totalorder %s15, 4
      %s25 = sphi 0, %s27
      %s28 = sphi 0, %s25
      %s29 = sphi 0, %s28
      %s45 = sphi 0, %s29
      %s49 = sphi 0, %s49
      %s51 = sphi 0, %s49
      %s52 = sphi 0, %s51
      %s66 = sphi 0, %s52
      %s70 = sphi 0, %s70
      %s72 = sphi 0, %s70
      %s73 = sphi 0, %s72
      %s87 = sphi 0, %s73
      %s91 = sphi 0, %s91
      %s93 = sphi 0, %s91
      %s94 = sphi 0, %s93
      %s108 = sphi 0, %s94
      %s112 = sphi 0, %s112
      %s114 = sphi 0, %s112
      %s115 = sphi 0, %s114
      %s129 = sphi 0, %s115
      %s133 = sphi 0, %s133
      %s135 = sphi 0, %s133
      %s136 = sphi 0, %s135
      %s150 = sphi 0, %s136
      %s156 = sphi 0, %s158
      %s159 = sphi 0, %s156
      %s160 = sphi 0, %s159
      %s176 = sphi 0, %s160
    $region4: #{tpu_custom_call.1} parent=1 // loop_header_branch
      %18 = sbr.rel (%p16) target = $region8
    $region5: #{tpu_custom_call.1} parent=1 // loop_body
      %s20 = ssub.s32 %s15, 1
      %s21 = ssub.s32 %s15, 2
      %s22 = sadd.s32 %s15, 1
      %s23 = ssub.s32 %s15, %s22
      %p24 = scmp.eq.s32.totalorder %s23, 0
      %s26 = sadd.s32 %s25, 1
      %s27 = scalar_select %p24, %s25, %s26
      %p30 = pneg %p24
      %p31 = scmp.eq.s32.totalorder %s15, 1
      %p32 = por %p30, %p31
      %p33 = scmp.ne.s32.totalorder %s25, %s28
      %p34 = scmp.eq.s32.totalorder %s15, 0
      %p35 = por %p33, %p34
      %p36 = scmp.ne.s32.totalorder %s25, %s28
      %p37 = scmp.eq.s32.totalorder %s20, 1
      %p38 = por %p36, %p37
      %p39 = scmp.ne.s32.totalorder %s28, %s29
      %p40 = scmp.eq.s32.totalorder %s20, 0
      %p41 = por %p39, %p40
      %p42 = scmp.ne.s32.totalorder %s28, %s29
      %p43 = scmp.eq.s32.totalorder %s21, 1
      %p44 = por %p42, %p43
      %p46 = scmp.ne.s32.totalorder %s29, %s45
      %p47 = scmp.eq.s32.totalorder %s21, 0
      %p48 = por %p46, %p47
      %s50 = sadd.s32 %s49, 1
      %p53 = scmp.eq.s32.totalorder %s15, 1
      %p54 = scmp.ne.s32.totalorder %s49, %s51
      %p55 = scmp.eq.s32.totalorder %s15, 0
      %p56 = por %p54, %p55
      %p57 = scmp.ne.s32.totalorder %s49, %s51
      %p58 = scmp.eq.s32.totalorder %s20, 1
      %p59 = por %p57, %p58
      %p60 = scmp.ne.s32.totalorder %s51, %s52
      %p61 = scmp.eq.s32.totalorder %s20, 0
      %p62 = por %p60, %p61
      %p63 = scmp.ne.s32.totalorder %s51, %s52
      %p64 = scmp.eq.s32.totalorder %s21, 1
      %p65 = por %p63, %p64
      %p67 = scmp.ne.s32.totalorder %s52, %s66
      %p68 = scmp.eq.s32.totalorder %s21, 0
      %p69 = por %p67, %p68
      %s71 = sadd.s32 %s70, 1
      %p74 = scmp.eq.s32.totalorder %s15, 1
      %p75 = scmp.ne.s32.totalorder %s70, %s72
      %p76 = scmp.eq.s32.totalorder %s15, 0
      %p77 = por %p75, %p76
      %p78 = scmp.ne.s32.totalorder %s70, %s72
      %p79 = scmp.eq.s32.totalorder %s20, 1
      %p80 = por %p78, %p79
      %p81 = scmp.ne.s32.totalorder %s72, %s73
      %p82 = scmp.eq.s32.totalorder %s20, 0
      %p83 = por %p81, %p82
      %p84 = scmp.ne.s32.totalorder %s72, %s73
      %p85 = scmp.eq.s32.totalorder %s21, 1
      %p86 = por %p84, %p85
      %p88 = scmp.ne.s32.totalorder %s73, %s87
      %p89 = scmp.eq.s32.totalorder %s21, 0
      %p90 = por %p88, %p89
      %s92 = sadd.s32 %s91, 1
      %p95 = scmp.eq.s32.totalorder %s15, 1
      %p96 = scmp.ne.s32.totalorder %s91, %s93
      %p97 = scmp.eq.s32.totalorder %s15, 0
      %p98 = por %p96, %p97
      %p99 = scmp.ne.s32.totalorder %s91, %s93
      %p100 = scmp.eq.s32.totalorder %s20, 1
      %p101 = por %p99, %p100
      %p102 = scmp.ne.s32.totalorder %s93, %s94
      %p103 = scmp.eq.s32.totalorder %s20, 0
      %p104 = por %p102, %p103
      %p105 = scmp.ne.s32.totalorder %s93, %s94
      %p106 = scmp.eq.s32.totalorder %s21, 1
      %p107 = por %p105, %p106
      %p109 = scmp.ne.s32.totalorder %s94, %s108
      %p110 = scmp.eq.s32.totalorder %s21, 0
      %p111 = por %p109, %p110
      %s113 = sadd.s32 %s112, 1
      %p116 = scmp.eq.s32.totalorder %s15, 1
      %p117 = scmp.ne.s32.totalorder %s112, %s114
      %p118 = scmp.eq.s32.totalorder %s15, 0
      %p119 = por %p117, %p118
      %p120 = scmp.ne.s32.totalorder %s112, %s114
      %p121 = scmp.eq.s32.totalorder %s20, 1
      %p122 = por %p120, %p121
      %p123 = scmp.ne.s32.totalorder %s114, %s115
      %p124 = scmp.eq.s32.totalorder %s20, 0
      %p125 = por %p123, %p124
      %p126 = scmp.ne.s32.totalorder %s114, %s115
      %p127 = scmp.eq.s32.totalorder %s21, 1
      %p128 = por %p126, %p127
      %p130 = scmp.ne.s32.totalorder %s115, %s129
      %p131 = scmp.eq.s32.totalorder %s21, 0
      %p132 = por %p130, %p131
      %s134 = sadd.s32 %s133, 1
      %p137 = scmp.eq.s32.totalorder %s15, 1
      %p138 = scmp.ne.s32.totalorder %s133, %s135
      %p139 = scmp.eq.s32.totalorder %s15, 0
      %p140 = por %p138, %p139
      %p141 = scmp.ne.s32.totalorder %s133, %s135
      %p142 = scmp.eq.s32.totalorder %s20, 1
      %p143 = por %p141, %p142
      %p144 = scmp.ne.s32.totalorder %s135, %s136
      %p145 = scmp.eq.s32.totalorder %s20, 0
      %p146 = por %p144, %p145
      %p147 = scmp.ne.s32.totalorder %s135, %s136
      %p148 = scmp.eq.s32.totalorder %s21, 1
      %p149 = por %p147, %p148
      %p151 = scmp.ne.s32.totalorder %s136, %s150
      %p152 = scmp.eq.s32.totalorder %s21, 0
      %p153 = por %p151, %p152
      %s154 = ssub.s32 %s15, %s22
      %p155 = scmp.eq.s32.totalorder %s154, 0
      %s157 = sadd.s32 %s156, 1
      %s158 = scalar_select %p155, %s156, %s157
      %p161 = pneg %p155
      %p162 = scmp.eq.s32.totalorder %s15, 1
      %p163 = por %p161, %p162
      %p164 = scmp.ne.s32.totalorder %s156, %s159
      %p165 = scmp.eq.s32.totalorder %s15, 0
      %p166 = por %p164, %p165
      %p167 = scmp.ne.s32.totalorder %s156, %s159
      %p168 = scmp.eq.s32.totalorder %s20, 1
      %p169 = por %p167, %p168
      %p170 = scmp.ne.s32.totalorder %s159, %s160
      %p171 = scmp.eq.s32.totalorder %s20, 0
      %p172 = por %p170, %p171
      %p173 = scmp.ne.s32.totalorder %s159, %s160
      %p174 = scmp.eq.s32.totalorder %s21, 1
      %p175 = por %p173, %p174
      %p177 = scmp.ne.s32.totalorder %s160, %s176
      %p178 = scmp.eq.s32.totalorder %s21, 0
      %p179 = por %p177, %p178
      %p180 = scmp.le.s32.totalorder 1, %s15
      %p181 = scmp.lt.s32.totalorder %s15, 3
      %p182 = pnand %p180, %p181
      %p183 = pneg %p182
      // Predicated region
      $region9: #{tpu_custom_call.1} parent=5 // pred_check
        _
      $region10: #{tpu_custom_call.1} parent=5 // pred_check_branch
        %185 = sbr.rel (%p182) target = $region12
      $region11: #{tpu_custom_call.1} parent=5 // pred_region
        %s186 = ssub.s32 %s15, 1
        // Predicated region
        $region13: #{tpu_custom_call.1} parent=11 // pred_check
          %p187 = pneg %p62
        $region14: #{tpu_custom_call.1} parent=11 // pred_check_branch
          %189 = sbr.rel (%p187) target = $region16
        $region15: #{tpu_custom_call.1} parent=11 // pred_region
          _
        $region16: #{tpu_custom_call.1} parent=11 // pred_fallthru
          _
        // Predicated region
        $region17: #{tpu_custom_call.1} parent=11 // pred_check
          %p190 = pneg %p83
        $region18: #{tpu_custom_call.1} parent=11 // pred_check_branch
          %192 = sbr.rel (%p190) target = $region20
        $region19: #{tpu_custom_call.1} parent=11 // pred_region
          _
        $region20: #{tpu_custom_call.1} parent=11 // pred_fallthru
          _
        // Predicated region
        $region21: #{tpu_custom_call.1} parent=11 // pred_check
          %p193 = pneg %p104
        $region22: #{tpu_custom_call.1} parent=11 // pred_check_branch
          %195 = sbr.rel (%p193) target = $region24
        $region23: #{tpu_custom_call.1} parent=11 // pred_region
          _
        $region24: #{tpu_custom_call.1} parent=11 // pred_fallthru
          _
        // Predicated region
        $region25: #{tpu_custom_call.1} parent=11 // pred_check
          %p196 = pneg %p125
        $region26: #{tpu_custom_call.1} parent=11 // pred_check_branch
          %198 = sbr.rel (%p196) target = $region28
        $region27: #{tpu_custom_call.1} parent=11 // pred_region
          _
        $region28: #{tpu_custom_call.1} parent=11 // pred_fallthru
          _
        // Predicated region
        $region29: #{tpu_custom_call.1} parent=11 // pred_check
          %p199 = pneg %p146
        $region30: #{tpu_custom_call.1} parent=11 // pred_check_branch
          %201 = sbr.rel (%p199) target = $region32
        $region31: #{tpu_custom_call.1} parent=11 // pred_region
          _
        $region32: #{tpu_custom_call.1} parent=11 // pred_fallthru
          _
      $region12: #{tpu_custom_call.1} parent=5 // pred_fallthru
        _
      %p202 = scmp.lt.s32.totalorder %s15, 2
      // Predicated region
      $region33: #{tpu_custom_call.1} parent=5 // pred_check
        %p203 = pneg %p202
      $region34: #{tpu_custom_call.1} parent=5 // pred_check_branch
        %205 = sbr.rel (%p203) target = $region36
      $region35: #{tpu_custom_call.1} parent=5 // pred_region
        // Predicated region
        $region37: #{tpu_custom_call.1} parent=35 // pred_check
          %p206 = pneg %p35
        $region38: #{tpu_custom_call.1} parent=35 // pred_check_branch
          %208 = sbr.rel (%p206) target = $region40
        $region39: #{tpu_custom_call.1} parent=35 // pred_region
          %s209 = smul.u32 16, %s15
          %p210 = scmp.lt.s32.totalorder %s209, 31
          %s211 = scalar_select %p210, %s209, 31
          %s212 = smul.addr %s211, 8
          %s213 = scalar_lea.vmem %s0, %s212
          %s214 = smul.u32 16, %s15
        $region40: #{tpu_custom_call.1} parent=35 // pred_fallthru
          _
      $region36: #{tpu_custom_call.1} parent=5 // pred_fallthru
        _
      %p215 = scmp.le.s32.totalorder 1, %s15
      %p216 = scmp.lt.s32.totalorder %s15, 3
      %p217 = pnand %p215, %p216
      %p218 = pneg %p217
      // Predicated region
      $region41: #{tpu_custom_call.1} parent=5 // pred_check
        _
      $region42: #{tpu_custom_call.1} parent=5 // pred_check_branch
        %220 = sbr.rel (%p217) target = $region44
      $region43: #{tpu_custom_call.1} parent=5 // pred_region
        %s221 = ssub.s32 %s15, 1
        %s222 = smul.u32 16, %s20
        %p223 = scmp.lt.s32.totalorder %s222, 31
        %s224 = scalar_select %p223, %s222, 31
        %s225 = smul.addr %s224, 8
        %s226 = scalar_lea.vmem %s0, %s225
        %p227 = pneg %p41
        %p228 = pneg %p38
        %p229 = pneg %p62
        %p230 = pneg %p59
        %p231 = pneg %p83
        %p232 = pneg %p80
        %p233 = pneg %p104
        %p234 = pneg %p101
        %p235 = pneg %p125
        %p236 = pneg %p122
        %p237 = pneg %p146
        %p238 = pneg %p143
        %p239 = pneg %p172
        %p240 = pneg %p169
        %s241 = sand.u32 %s159, 1
        %s242 = scalar_lea.sflag [#allocation3], %s241
        %s243 = sand.u32 %s159, 1
        %s244 = smul.addr %s243, 128
        %s245 = scalar_lea.vmem [#allocation2], %s244
        %s246 = smul.u32 16, %s20
        %p247 = scmp.lt.s32.totalorder %s246, 31
        %s248 = scalar_select %p247, %s246, 31
        %s249 = smul.addr %s248, 8
        %s250 = scalar_lea.vmem %s0, %s249
        %s251 = smul.u32 16, %s20
        %s252 = smul.u32 16, %s20
        %v253 = vld [vmem:[%s250] sm:$0xff]
        %v254 = vld [vmem:[%s250 + $0x8] sm:$0xff]
        %v255 = vld [vmem:[%s250 + $0x10] sm:$0xff]
        %v256 = vld [vmem:[%s250 + $0x18] sm:$0xff]
        %v257 = vld [vmem:[%s250 + $0x20] sm:$0xff]
        %v258 = vld [vmem:[%s250 + $0x28] sm:$0xff]
        %v259 = vld [vmem:[%s250 + $0x30] sm:$0xff]
        %v260 = vld [vmem:[%s250 + $0x38] sm:$0xff]
        %v261 = vld [vmem:[%s250 + $0x40] sm:$0xff]
        %v262 = vld [vmem:[%s250 + $0x48] sm:$0xff]
        %v263 = vld [vmem:[%s250 + $0x50] sm:$0xff]
        %v264 = vld [vmem:[%s250 + $0x58] sm:$0xff]
        %v265 = vld [vmem:[%s250 + $0x60] sm:$0xff]
        %v266 = vld [vmem:[%s250 + $0x68] sm:$0xff]
        %v267 = vld [vmem:[%s250 + $0x70] sm:$0xff]
        %v268 = vld [vmem:[%s250 + $0x78] sm:$0xff]
        %v269 = vtanh.pop %v253
        %v270 = vtanh.pop %v254
        %v271 = vtanh.pop %v255
        %v272 = vtanh.pop %v256
        %v273 = vtanh.pop %v257
        %v274 = vtanh.pop %v258
        %v275 = vtanh.pop %v259
        %v276 = vtanh.pop %v260
        %v277 = vtanh.pop %v261
        %v278 = vtanh.pop %v262
        %v279 = vtanh.pop %v263
        %v280 = vtanh.pop %v264
        %v281 = vtanh.pop %v265
        %v282 = vtanh.pop %v266
        %v283 = vtanh.pop %v267
        %v284 = vtanh.pop %v268
        %v285 = vld [vmem:[%s1] sm:$0xff]
        %v286 = vld [vmem:[%s1 + $0x8] sm:$0xff]
        %v287 = vld [vmem:[%s1 + $0x10] sm:$0xff]
        %v288 = vld [vmem:[%s1 + $0x18] sm:$0xff]
        %v289 = vld [vmem:[%s1 + $0x20] sm:$0xff]
        %v290 = vld [vmem:[%s1 + $0x28] sm:$0xff]
        %v291 = vld [vmem:[%s1 + $0x30] sm:$0xff]
        %v292 = vld [vmem:[%s1 + $0x38] sm:$0xff]
        %v293 = vld [vmem:[%s1 + $0x40] sm:$0xff]
        %v294 = vld [vmem:[%s1 + $0x48] sm:$0xff]
        %v295 = vld [vmem:[%s1 + $0x50] sm:$0xff]
        %v296 = vld [vmem:[%s1 + $0x58] sm:$0xff]
        %v297 = vld [vmem:[%s1 + $0x60] sm:$0xff]
        %v298 = vld [vmem:[%s1 + $0x68] sm:$0xff]
        %v299 = vld [vmem:[%s1 + $0x70] sm:$0xff]
        %v300 = vld [vmem:[%s1 + $0x78] sm:$0xff]
        %v301 = vld [vmem:[%s2] sm:$0x3]
        %v303 = vlaneseq
        %v304 = vshrl.u32 %v303, 7
        %v305 = vsub.s32 0, %v304
        %v306 = vrot.slane %v301, %v305
        %v307 = vlaneseq
        %v308 = vshrl.u32 %v307, 7
        %v309 = vsub.s32 1, %v308
        %v310 = vrot.slane %v301, %v309
        %vm313 = vcmask 523264
        %v315 = vsel %vm313, %v269, 0
        %v318 = vsel %vm313, %v270, 0
        %v321 = vsel %vm313, %v271, 0
        %v324 = vsel %vm313, %v272, 0
        %v327 = vsel %vm313, %v273, 0
        %v330 = vsel %vm313, %v274, 0
        %v333 = vsel %vm313, %v275, 0
        %v336 = vsel %vm313, %v276, 0
        %v339 = vsel %vm313, %v277, 0
        %v342 = vsel %vm313, %v278, 0
        %v345 = vsel %vm313, %v279, 0
        %v348 = vsel %vm313, %v280, 0
        %v351 = vsel %vm313, %v281, 0
        %v354 = vsel %vm313, %v282, 0
        %v357 = vsel %vm313, %v283, 0
        %v360 = vsel %vm313, %v284, 0
        %362 = vmatprep.subr.mxu0 %v286
        %363 = vmatpush1.msra.mxu0 %v285
        %364 = vmatprep.subr.mxu0 %v288
        %365 = vmatpush1.msra.mxu0 %v287
        %366 = vmatprep.subr.mxu0 %v290
        %367 = vmatpush1.msra.mxu0 %v289
        %368 = vmatprep.subr.mxu0 %v292
        %369 = vmatpush1.msra.mxu0 %v291
        %370 = vmatprep.subr.mxu0 %v294
        %371 = vmatpush1.msra.mxu0 %v293
        %372 = vmatprep.subr.mxu0 %v296
        %373 = vmatpush1.msra.mxu0 %v295
        %374 = vmatprep.subr.mxu0 %v298
        %375 = vmatpush1.msra.mxu0 %v297
        %376 = vmatprep.subr.mxu0 %v300
        %377 = vmatpush1.msra.mxu0 %v299
        %378 = vmatprep.subr.mxu0 0.0
        %379 = vmatpush1.msra.mxu0 0.0
        %380 = vmatprep.subr.mxu0 0.0
        %381 = vmatpush1.msra.mxu0 0.0
        %382 = vmatprep.subr.mxu0 0.0
        %383 = vmatpush1.msra.mxu0 0.0
        %384 = vmatprep.subr.mxu0 0.0
        %385 = vmatpush1.msra.mxu0 0.0
        %386 = vmatprep.subr.mxu0 0.0
        %387 = vmatpush1.msra.mxu0 0.0
        %388 = vmatprep.subr.mxu0 0.0
        %389 = vmatpush1.msra.mxu0 0.0
        %390 = vmatprep.subr.mxu0 0.0
        %391 = vmatpush1.msra.mxu0 0.0
        %392 = vmatprep.subr.mxu0 0.0
        %393 = vmatpush1.msra.mxu0 0.0
        %394 = vmatprep.subr.mxu0 0.0
        %395 = vmatpush1.msra.mxu0 0.0
        %396 = vmatprep.subr.mxu0 0.0
        %397 = vmatpush1.msra.mxu0 0.0
        %398 = vmatprep.subr.mxu0 0.0
        %399 = vmatpush1.msra.mxu0 0.0
        %400 = vmatprep.subr.mxu0 0.0
        %401 = vmatpush1.msra.mxu0 0.0
        %402 = vmatprep.subr.mxu0 0.0
        %403 = vmatpush1.msra.mxu0 0.0
        %404 = vmatprep.subr.mxu0 0.0
        %405 = vmatpush1.msra.mxu0 0.0
        %406 = vmatprep.subr.mxu0 0.0
        %407 = vmatpush1.msra.mxu0 0.0
        %408 = vmatprep.subr.mxu0 0.0
        %409 = vmatpush1.msra.mxu0 0.0
        %410 = vmatprep.subr.mxu0 0.0
        %411 = vmatpush1.msra.mxu0 0.0
        %412 = vmatprep.subr.mxu0 0.0
        %413 = vmatpush1.msra.mxu0 0.0
        %414 = vmatprep.subr.mxu0 0.0
        %415 = vmatpush1.msra.mxu0 0.0
        %416 = vmatprep.subr.mxu0 0.0
        %417 = vmatpush1.msra.mxu0 0.0
        %418 = vmatprep.subr.mxu0 0.0
        %419 = vmatpush1.msra.mxu0 0.0
        %420 = vmatprep.subr.mxu0 0.0
        %421 = vmatpush1.msra.mxu0 0.0
        %422 = vmatprep.subr.mxu0 0.0
        %423 = vmatpush1.msra.mxu0 0.0
        %424 = vmatprep.subr.mxu0 0.0
        %425 = vmatpush1.msra.mxu0 0.0
        %426 = vmatprep.mubr.f32.mxu0 0.0
        %427 = vmatmul.mubr.f32.gmra.mrb[0].mxu0 %v315
        %v428 = vpop.f32.mrb[0].mxu0
        %v429 = vadd.f32 %v306, %v428
        %v430 = vpop.f32.mrb[0].mxu0
        %v431 = vadd.f32 %v310, %v430
        %432 = vmatprep.mubr.f32.mxu0 0.0
        %433 = vmatmul.mubr.f32.gmra.mrb[0].mxu0 %v318
        %v434 = vpop.f32.mrb[0].mxu0
        %v435 = vadd.f32 %v306, %v434
        %v436 = vpop.f32.mrb[0].mxu0
        %v437 = vadd.f32 %v310, %v436
        %438 = vmatprep.mubr.f32.mxu0 0.0
        %439 = vmatmul.mubr.f32.gmra.mrb[0].mxu0 %v321
        %v440 = vpop.f32.mrb[0].mxu0
        %v441 = vadd.f32 %v306, %v440
        %v442 = vpop.f32.mrb[0].mxu0
        %v443 = vadd.f32 %v310, %v442
        %444 = vmatprep.mubr.f32.mxu0 0.0
        %445 = vmatmul.mubr.f32.gmra.mrb[0].mxu0 %v324
        %v446 = vpop.f32.mrb[0].mxu0
        %v447 = vadd.f32 %v306, %v446
        %v448 = vpop.f32.mrb[0].mxu0
        %v449 = vadd.f32 %v310, %v448
        %450 = vmatprep.mubr.f32.mxu0 0.0
        %451 = vmatmul.mubr.f32.gmra.mrb[0].mxu0 %v327
        %v452 = vpop.f32.mrb[0].mxu0
        %v453 = vadd.f32 %v306, %v452
        %v454 = vpop.f32.mrb[0].mxu0
        %v455 = vadd.f32 %v310, %v454
        %456 = vmatprep.mubr.f32.mxu0 0.0
        %457 = vmatmul.mubr.f32.gmra.mrb[0].mxu0 %v330
        %v458 = vpop.f32.mrb[0].mxu0
        %v459 = vadd.f32 %v306, %v458
        %v460 = vpop.f32.mrb[0].mxu0
        %v461 = vadd.f32 %v310, %v460
        %462 = vmatprep.mubr.f32.mxu0 0.0
        %463 = vmatmul.mubr.f32.gmra.mrb[0].mxu0 %v333
        %v464 = vpop.f32.mrb[0].mxu0
        %v465 = vadd.f32 %v306, %v464
        %v466 = vpop.f32.mrb[0].mxu0
        %v467 = vadd.f32 %v310, %v466
        %468 = vmatprep.mubr.f32.mxu0 0.0
        %469 = vmatmul.mubr.f32.gmra.mrb[0].mxu0 %v336
        %v470 = vpop.f32.mrb[0].mxu0
        %v471 = vadd.f32 %v306, %v470
        %v472 = vpop.f32.mrb[0].mxu0
        %v473 = vadd.f32 %v310, %v472
        %474 = vmatprep.mubr.f32.mxu0 0.0
        %475 = vmatmul.mubr.f32.gmra.mrb[0].mxu0 %v339
        %v476 = vpop.f32.mrb[0].mxu0
        %v477 = vadd.f32 %v306, %v476
        %v478 = vpop.f32.mrb[0].mxu0
        %v479 = vadd.f32 %v310, %v478
        %480 = vmatprep.mubr.f32.mxu0 0.0
        %481 = vmatmul.mubr.f32.gmra.mrb[0].mxu0 %v342
        %v482 = vpop.f32.mrb[0].mxu0
        %v483 = vadd.f32 %v306, %v482
        %v484 = vpop.f32.mrb[0].mxu0
        %v485 = vadd.f32 %v310, %v484
        %486 = vmatprep.mubr.f32.mxu0 0.0
        %487 = vmatmul.mubr.f32.gmra.mrb[0].mxu0 %v345
        %v488 = vpop.f32.mrb[0].mxu0
        %v489 = vadd.f32 %v306, %v488
        %v490 = vpop.f32.mrb[0].mxu0
        %v491 = vadd.f32 %v310, %v490
        %492 = vmatprep.mubr.f32.mxu0 0.0
        %493 = vmatmul.mubr.f32.gmra.mrb[0].mxu0 %v348
        %v494 = vpop.f32.mrb[0].mxu0
        %v495 = vadd.f32 %v306, %v494
        %v496 = vpop.f32.mrb[0].mxu0
        %v497 = vadd.f32 %v310, %v496
        %498 = vmatprep.mubr.f32.mxu0 0.0
        %499 = vmatmul.mubr.f32.gmra.mrb[0].mxu0 %v351
        %v500 = vpop.f32.mrb[0].mxu0
        %v501 = vadd.f32 %v306, %v500
        %v502 = vpop.f32.mrb[0].mxu0
        %v503 = vadd.f32 %v310, %v502
        %504 = vmatprep.mubr.f32.mxu0 0.0
        %505 = vmatmul.mubr.f32.gmra.mrb[0].mxu0 %v354
        %v506 = vpop.f32.mrb[0].mxu0
        %v507 = vadd.f32 %v306, %v506
        %v508 = vpop.f32.mrb[0].mxu0
        %v509 = vadd.f32 %v310, %v508
        %510 = vmatprep.mubr.f32.mxu0 0.0
        %511 = vmatmul.mubr.f32.gmra.mrb[0].mxu0 %v357
        %v512 = vpop.f32.mrb[0].mxu0
        %v513 = vadd.f32 %v306, %v512
        %v514 = vpop.f32.mrb[0].mxu0
        %v515 = vadd.f32 %v310, %v514
        %516 = vmatprep.mubr.f32.mxu0 0.0
        %517 = vmatmul.mubr.f32.gmra.mrb[0].mxu0 %v360
        %v518 = vpop.f32.mrb[0].mxu0
        %v519 = vadd.f32 %v306, %v518
        %v520 = vpop.f32.mrb[0].mxu0
        %v521 = vadd.f32 %v310, %v520
        %522 = vdwg.mxu0
        %v523 = vmax.f32 %v429, 0.0
        %v524 = vmax.f32 %v431, 0.0
        %v525 = vmax.f32 %v435, 0.0
        %v526 = vmax.f32 %v437, 0.0
        %v527 = vmax.f32 %v441, 0.0
        %v528 = vmax.f32 %v443, 0.0
        %v529 = vmax.f32 %v447, 0.0
        %v530 = vmax.f32 %v449, 0.0
        %v531 = vmax.f32 %v453, 0.0
        %v532 = vmax.f32 %v455, 0.0
        %v533 = vmax.f32 %v459, 0.0
        %v534 = vmax.f32 %v461, 0.0
        %v535 = vmax.f32 %v465, 0.0
        %v536 = vmax.f32 %v467, 0.0
        %v537 = vmax.f32 %v471, 0.0
        %v538 = vmax.f32 %v473, 0.0
        %v539 = vmax.f32 %v477, 0.0
        %v540 = vmax.f32 %v479, 0.0
        %v541 = vmax.f32 %v483, 0.0
        %v542 = vmax.f32 %v485, 0.0
        %v543 = vmax.f32 %v489, 0.0
        %v544 = vmax.f32 %v491, 0.0
        %v545 = vmax.f32 %v495, 0.0
        %v546 = vmax.f32 %v497, 0.0
        %v547 = vmax.f32 %v501, 0.0
        %v548 = vmax.f32 %v503, 0.0
        %v549 = vmax.f32 %v507, 0.0
        %v550 = vmax.f32 %v509, 0.0
        %v551 = vmax.f32 %v513, 0.0
        %v552 = vmax.f32 %v515, 0.0
        %v553 = vmax.f32 %v519, 0.0
        %v554 = vmax.f32 %v521, 0.0
        %v555 = vld [vmem:[%s3] sm:$0xff]
        %v556 = vld [vmem:[%s3 + $0x8] sm:$0xff]
        %v557 = vld [vmem:[%s3 + $0x10] sm:$0xff]
        %v558 = vld [vmem:[%s3 + $0x18] sm:$0xff]
        %v559 = vld [vmem:[%s3 + $0x20] sm:$0xff]
        %v560 = vld [vmem:[%s3 + $0x28] sm:$0xff]
        %v561 = vld [vmem:[%s3 + $0x30] sm:$0xff]
        %v562 = vld [vmem:[%s3 + $0x38] sm:$0xff]
        %v563 = vld [vmem:[%s3 + $0x40] sm:$0xff]
        %v564 = vld [vmem:[%s3 + $0x48] sm:$0xff]
        %v565 = vld [vmem:[%s3 + $0x50] sm:$0xff]
        %v566 = vld [vmem:[%s3 + $0x58] sm:$0xff]
        %v567 = vld [vmem:[%s3 + $0x60] sm:$0xff]
        %v568 = vld [vmem:[%s3 + $0x68] sm:$0xff]
        %v569 = vld [vmem:[%s3 + $0x70] sm:$0xff]
        %v570 = vld [vmem:[%s3 + $0x78] sm:$0xff]
        %v571 = vld [vmem:[%s3 + $0x80] sm:$0xff]
        %v572 = vld [vmem:[%s3 + $0x88] sm:$0xff]
        %v573 = vld [vmem:[%s3 + $0x90] sm:$0xff]
        %v574 = vld [vmem:[%s3 + $0x98] sm:$0xff]
        %v575 = vld [vmem:[%s3 + $0xa0] sm:$0xff]
        %v576 = vld [vmem:[%s3 + $0xa8] sm:$0xff]
        %v577 = vld [vmem:[%s3 + $0xb0] sm:$0xff]
        %v578 = vld [vmem:[%s3 + $0xb8] sm:$0xff]
        %v579 = vld [vmem:[%s3 + $0xc0] sm:$0xff]
        %v580 = vld [vmem:[%s3 + $0xc8] sm:$0xff]
        %v581 = vld [vmem:[%s3 + $0xd0] sm:$0xff]
        %v582 = vld [vmem:[%s3 + $0xd8] sm:$0xff]
        %v583 = vld [vmem:[%s3 + $0xe0] sm:$0xff]
        %v584 = vld [vmem:[%s3 + $0xe8] sm:$0xff]
        %v585 = vld [vmem:[%s3 + $0xf0] sm:$0xff]
        %v586 = vld [vmem:[%s3 + $0xf8] sm:$0xff]
        %v587 = vld [vmem:[%s4] sm:$0x1]
        %v589 = vlaneseq
        %v590 = vshrl.u32 %v589, 7
        %v591 = vsub.s32 0, %v590
        %v592 = vrot.slane %v587, %v591
        %594 = vmatprep.subr.mxu0 0.0
        %595 = vmatpush1.msra.mxu0 %v555
        %596 = vmatprep.subr.mxu0 0.0
        %597 = vmatpush1.msra.mxu0 %v556
        %598 = vmatprep.subr.mxu0 0.0
        %599 = vmatpush1.msra.mxu0 %v557
        %600 = vmatprep.subr.mxu0 0.0
        %601 = vmatpush1.msra.mxu0 %v558
        %602 = vmatprep.subr.mxu0 0.0
        %603 = vmatpush1.msra.mxu0 %v559
        %604 = vmatprep.subr.mxu0 0.0
        %605 = vmatpush1.msra.mxu0 %v560
        %606 = vmatprep.subr.mxu0 0.0
        %607 = vmatpush1.msra.mxu0 %v561
        %608 = vmatprep.subr.mxu0 0.0
        %609 = vmatpush1.msra.mxu0 %v562
        %610 = vmatprep.subr.mxu0 0.0
        %611 = vmatpush1.msra.mxu0 %v563
        %612 = vmatprep.subr.mxu0 0.0
        %613 = vmatpush1.msra.mxu0 %v564
        %614 = vmatprep.subr.mxu0 0.0
        %615 = vmatpush1.msra.mxu0 %v565
        %616 = vmatprep.subr.mxu0 0.0
        %617 = vmatpush1.msra.mxu0 %v566
        %618 = vmatprep.subr.mxu0 0.0
        %619 = vmatpush1.msra.mxu0 %v567
        %620 = vmatprep.subr.mxu0 0.0
        %621 = vmatpush1.msra.mxu0 %v568
        %622 = vmatprep.subr.mxu0 0.0
        %623 = vmatpush1.msra.mxu0 %v569
        %624 = vmatprep.subr.mxu0 0.0
        %625 = vmatpush1.msra.mxu0 %v570
        %626 = vmatprep.subr.mxu0 0.0
        %627 = vmatpush1.msra.mxu0 %v571
        %628 = vmatprep.subr.mxu0 0.0
        %629 = vmatpush1.msra.mxu0 %v572
        %630 = vmatprep.subr.mxu0 0.0
        %631 = vmatpush1.msra.mxu0 %v573
        %632 = vmatprep.subr.mxu0 0.0
        %633 = vmatpush1.msra.mxu0 %v574
        %634 = vmatprep.subr.mxu0 0.0
        %635 = vmatpush1.msra.mxu0 %v575
        %636 = vmatprep.subr.mxu0 0.0
        %637 = vmatpush1.msra.mxu0 %v576
        %638 = vmatprep.subr.mxu0 0.0
        %639 = vmatpush1.msra.mxu0 %v577
        %640 = vmatprep.subr.mxu0 0.0
        %641 = vmatpush1.msra.mxu0 %v578
        %642 = vmatprep.subr.mxu0 0.0
        %643 = vmatpush1.msra.mxu0 %v579
        %644 = vmatprep.subr.mxu0 0.0
        %645 = vmatpush1.msra.mxu0 %v580
        %646 = vmatprep.subr.mxu0 0.0
        %647 = vmatpush1.msra.mxu0 %v581
        %648 = vmatprep.subr.mxu0 0.0
        %649 = vmatpush1.msra.mxu0 %v582
        %650 = vmatprep.subr.mxu0 0.0
        %651 = vmatpush1.msra.mxu0 %v583
        %652 = vmatprep.subr.mxu0 0.0
        %653 = vmatpush1.msra.mxu0 %v584
        %654 = vmatprep.subr.mxu0 0.0
        %655 = vmatpush1.msra.mxu0 %v585
        %656 = vmatprep.subr.mxu0 0.0
        %657 = vmatpush1.msra.mxu0 %v586
        %658 = vmatprep.mubr.f32.mxu0 %v524
        %659 = vmatmul.mubr.f32.gmra.mrb[0].mxu0 %v523
        %v660 = vpop.f32.mrb[0].mxu0
        %v661 = vadd.f32 %v592, %v660
        %v662 = vpop.f32.mrb[0].mxu0
        %663 = vmatprep.mubr.f32.mxu0 %v526
        %664 = vmatmul.mubr.f32.gmra.mrb[0].mxu0 %v525
        %v665 = vpop.f32.mrb[0].mxu0
        %v666 = vadd.f32 %v592, %v665
        %v667 = vpop.f32.mrb[0].mxu0
        %668 = vmatprep.mubr.f32.mxu0 %v528
        %669 = vmatmul.mubr.f32.gmra.mrb[0].mxu0 %v527
        %v670 = vpop.f32.mrb[0].mxu0
        %v671 = vadd.f32 %v592, %v670
        %v672 = vpop.f32.mrb[0].mxu0
        %673 = vmatprep.mubr.f32.mxu0 %v530
        %674 = vmatmul.mubr.f32.gmra.mrb[0].mxu0 %v529
        %v675 = vpop.f32.mrb[0].mxu0
        %v676 = vadd.f32 %v592, %v675
        %v677 = vpop.f32.mrb[0].mxu0
        %678 = vmatprep.mubr.f32.mxu0 %v532
        %679 = vmatmul.mubr.f32.gmra.mrb[0].mxu0 %v531
        %v680 = vpop.f32.mrb[0].mxu0
        %v681 = vadd.f32 %v592, %v680
        %v682 = vpop.f32.mrb[0].mxu0
        %683 = vmatprep.mubr.f32.mxu0 %v534
        %684 = vmatmul.mubr.f32.gmra.mrb[0].mxu0 %v533
        %v685 = vpop.f32.mrb[0].mxu0
        %v686 = vadd.f32 %v592, %v685
        %v687 = vpop.f32.mrb[0].mxu0
        %688 = vmatprep.mubr.f32.mxu0 %v536
        %689 = vmatmul.mubr.f32.gmra.mrb[0].mxu0 %v535
        %v690 = vpop.f32.mrb[0].mxu0
        %v691 = vadd.f32 %v592, %v690
        %v692 = vpop.f32.mrb[0].mxu0
        %693 = vmatprep.mubr.f32.mxu0 %v538
        %694 = vmatmul.mubr.f32.gmra.mrb[0].mxu0 %v537
        %v695 = vpop.f32.mrb[0].mxu0
        %v696 = vadd.f32 %v592, %v695
        %v697 = vpop.f32.mrb[0].mxu0
        %698 = vmatprep.mubr.f32.mxu0 %v540
        %699 = vmatmul.mubr.f32.gmra.mrb[0].mxu0 %v539
        %v700 = vpop.f32.mrb[0].mxu0
        %v701 = vadd.f32 %v592, %v700
        %v702 = vpop.f32.mrb[0].mxu0
        %703 = vmatprep.mubr.f32.mxu0 %v542
        %704 = vmatmul.mubr.f32.gmra.mrb[0].mxu0 %v541
        %v705 = vpop.f32.mrb[0].mxu0
        %v706 = vadd.f32 %v592, %v705
        %v707 = vpop.f32.mrb[0].mxu0
        %708 = vmatprep.mubr.f32.mxu0 %v544
        %709 = vmatmul.mubr.f32.gmra.mrb[0].mxu0 %v543
        %v710 = vpop.f32.mrb[0].mxu0
        %v711 = vadd.f32 %v592, %v710
        %v712 = vpop.f32.mrb[0].mxu0
        %713 = vmatprep.mubr.f32.mxu0 %v546
        %714 = vmatmul.mubr.f32.gmra.mrb[0].mxu0 %v545
        %v715 = vpop.f32.mrb[0].mxu0
        %v716 = vadd.f32 %v592, %v715
        %v717 = vpop.f32.mrb[0].mxu0
        %718 = vmatprep.mubr.f32.mxu0 %v548
        %719 = vmatmul.mubr.f32.gmra.mrb[0].mxu0 %v547
        %v720 = vpop.f32.mrb[0].mxu0
        %v721 = vadd.f32 %v592, %v720
        %v722 = vpop.f32.mrb[0].mxu0
        %723 = vmatprep.mubr.f32.mxu0 %v550
        %724 = vmatmul.mubr.f32.gmra.mrb[0].mxu0 %v549
        %v725 = vpop.f32.mrb[0].mxu0
        %v726 = vadd.f32 %v592, %v725
        %v727 = vpop.f32.mrb[0].mxu0
        %728 = vmatprep.mubr.f32.mxu0 %v552
        %729 = vmatmul.mubr.f32.gmra.mrb[0].mxu0 %v551
        %v730 = vpop.f32.mrb[0].mxu0
        %v731 = vadd.f32 %v592, %v730
        %v732 = vpop.f32.mrb[0].mxu0
        %733 = vmatprep.mubr.f32.mxu0 %v554
        %734 = vmatmul.mubr.f32.gmra.mrb[0].mxu0 %v553
        %v735 = vpop.f32.mrb[0].mxu0
        %v736 = vadd.f32 %v592, %v735
        %v737 = vpop.f32.mrb[0].mxu0
        %738 = vdwg.mxu0
        %v739 = vmax.f32 %v661, 0.0
        %v740 = vmax.f32 %v666, 0.0
        %v741 = vmax.f32 %v671, 0.0
        %v742 = vmax.f32 %v676, 0.0
        %v743 = vmax.f32 %v681, 0.0
        %v744 = vmax.f32 %v686, 0.0
        %v745 = vmax.f32 %v691, 0.0
        %v746 = vmax.f32 %v696, 0.0
        %v747 = vmax.f32 %v701, 0.0
        %v748 = vmax.f32 %v706, 0.0
        %v749 = vmax.f32 %v711, 0.0
        %v750 = vmax.f32 %v716, 0.0
        %v751 = vmax.f32 %v721, 0.0
        %v752 = vmax.f32 %v726, 0.0
        %v753 = vmax.f32 %v731, 0.0
        %v754 = vmax.f32 %v736, 0.0
        %v755 = vld [vmem:[%s5] sm:$0xff]
        %v756 = vld [vmem:[%s5 + $0x8] sm:$0xff]
        %v757 = vld [vmem:[%s5 + $0x10] sm:$0xff]
        %v758 = vld [vmem:[%s5 + $0x18] sm:$0xff]
        %vm759 = vcmask 261120
        %v761 = vsel %vm759, %v739, 0
        %v764 = vsel %vm759, %v740, 0
        %v767 = vsel %vm759, %v741, 0
        %v770 = vsel %vm759, %v742, 0
        %v773 = vsel %vm759, %v743, 0
        %v776 = vsel %vm759, %v744, 0
        %v779 = vsel %vm759, %v745, 0
        %v782 = vsel %vm759, %v746, 0
        %v785 = vsel %vm759, %v747, 0
        %v788 = vsel %vm759, %v748, 0
        %v791 = vsel %vm759, %v749, 0
        %v794 = vsel %vm759, %v750, 0
        %v797 = vsel %vm759, %v751, 0
        %v800 = vsel %vm759, %v752, 0
        %v803 = vsel %vm759, %v753, 0
        %v806 = vsel %vm759, %v754, 0
        %808 = vmatprep.subr.mxu0 0.0
        %809 = vmatpush1.msra.mxu0 %v755
        %810 = vmatprep.subr.mxu0 0.0
        %811 = vmatpush1.msra.mxu0 %v756
        %812 = vmatprep.subr.mxu0 0.0
        %813 = vmatpush1.msra.mxu0 %v757
        %814 = vmatprep.subr.mxu0 0.0
        %815 = vmatpush1.msra.mxu0 %v758
        %816 = vmatprep.subr.mxu0 0.0
        %817 = vmatpush1.msra.mxu0 0.0
        %818 = vmatprep.subr.mxu0 0.0
        %819 = vmatpush1.msra.mxu0 0.0
        %820 = vmatprep.subr.mxu0 0.0
        %821 = vmatpush1.msra.mxu0 0.0
        %822 = vmatprep.subr.mxu0 0.0
        %823 = vmatpush1.msra.mxu0 0.0
        %824 = vmatprep.subr.mxu0 0.0
        %825 = vmatpush1.msra.mxu0 0.0
        %826 = vmatprep.subr.mxu0 0.0
        %827 = vmatpush1.msra.mxu0 0.0
        %828 = vmatprep.subr.mxu0 0.0
        %829 = vmatpush1.msra.mxu0 0.0
        %830 = vmatprep.subr.mxu0 0.0
        %831 = vmatpush1.msra.mxu0 0.0
        %832 = vmatprep.subr.mxu0 0.0
        %833 = vmatpush1.msra.mxu0 0.0
        %834 = vmatprep.subr.mxu0 0.0
        %835 = vmatpush1.msra.mxu0 0.0
        %836 = vmatprep.subr.mxu0 0.0
        %837 = vmatpush1.msra.mxu0 0.0
        %838 = vmatprep.subr.mxu0 0.0
        %839 = vmatpush1.msra.mxu0 0.0
        %840 = vmatprep.subr.mxu0 0.0
        %841 = vmatpush1.msra.mxu0 0.0
        %842 = vmatprep.subr.mxu0 0.0
        %843 = vmatpush1.msra.mxu0 0.0
        %844 = vmatprep.subr.mxu0 0.0
        %845 = vmatpush1.msra.mxu0 0.0
        %846 = vmatprep.subr.mxu0 0.0
        %847 = vmatpush1.msra.mxu0 0.0
        %848 = vmatprep.subr.mxu0 0.0
        %849 = vmatpush1.msra.mxu0 0.0
        %850 = vmatprep.subr.mxu0 0.0
        %851 = vmatpush1.msra.mxu0 0.0
        %852 = vmatprep.subr.mxu0 0.0
        %853 = vmatpush1.msra.mxu0 0.0
        %854 = vmatprep.subr.mxu0 0.0
        %855 = vmatpush1.msra.mxu0 0.0
        %856 = vmatprep.subr.mxu0 0.0
        %857 = vmatpush1.msra.mxu0 0.0
        %858 = vmatprep.subr.mxu0 0.0
        %859 = vmatpush1.msra.mxu0 0.0
        %860 = vmatprep.subr.mxu0 0.0
        %861 = vmatpush1.msra.mxu0 0.0
        %862 = vmatprep.subr.mxu0 0.0
        %863 = vmatpush1.msra.mxu0 0.0
        %864 = vmatprep.subr.mxu0 0.0
        %865 = vmatpush1.msra.mxu0 0.0
        %866 = vmatprep.subr.mxu0 0.0
        %867 = vmatpush1.msra.mxu0 0.0
        %868 = vmatprep.subr.mxu0 0.0
        %869 = vmatpush1.msra.mxu0 0.0
        %870 = vmatprep.subr.mxu0 0.0
        %871 = vmatpush1.msra.mxu0 0.0
        %872 = vmatprep.mubr.f32.mxu0 0.0
        %873 = vmatmul.mubr.f32.gmra.mrb[0].mxu0 %v761
        %v874 = vpop.f32.mrb[0].mxu0
        %v875 = vadd.f32 0.0, %v874
        %v876 = vpop.f32.mrb[0].mxu0
        %877 = vmatprep.mubr.f32.mxu0 0.0
        %878 = vmatmul.mubr.f32.gmra.mrb[0].mxu0 %v764
        %v879 = vpop.f32.mrb[0].mxu0
        %v880 = vadd.f32 0.0, %v879
        %v881 = vpop.f32.mrb[0].mxu0
        %882 = vmatprep.mubr.f32.mxu0 0.0
        %883 = vmatmul.mubr.f32.gmra.mrb[0].mxu0 %v767
        %v884 = vpop.f32.mrb[0].mxu0
        %v885 = vadd.f32 0.0, %v884
        %v886 = vpop.f32.mrb[0].mxu0
        %887 = vmatprep.mubr.f32.mxu0 0.0
        %888 = vmatmul.mubr.f32.gmra.mrb[0].mxu0 %v770
        %v889 = vpop.f32.mrb[0].mxu0
        %v890 = vadd.f32 0.0, %v889
        %v891 = vpop.f32.mrb[0].mxu0
        %892 = vmatprep.mubr.f32.mxu0 0.0
        %893 = vmatmul.mubr.f32.gmra.mrb[0].mxu0 %v773
        %v894 = vpop.f32.mrb[0].mxu0
        %v895 = vadd.f32 0.0, %v894
        %v896 = vpop.f32.mrb[0].mxu0
        %897 = vmatprep.mubr.f32.mxu0 0.0
        %898 = vmatmul.mubr.f32.gmra.mrb[0].mxu0 %v776
        %v899 = vpop.f32.mrb[0].mxu0
        %v900 = vadd.f32 0.0, %v899
        %v901 = vpop.f32.mrb[0].mxu0
        %902 = vmatprep.mubr.f32.mxu0 0.0
        %903 = vmatmul.mubr.f32.gmra.mrb[0].mxu0 %v779
        %v904 = vpop.f32.mrb[0].mxu0
        %v905 = vadd.f32 0.0, %v904
        %v906 = vpop.f32.mrb[0].mxu0
        %907 = vmatprep.mubr.f32.mxu0 0.0
        %908 = vmatmul.mubr.f32.gmra.mrb[0].mxu0 %v782
        %v909 = vpop.f32.mrb[0].mxu0
        %v910 = vadd.f32 0.0, %v909
        %v911 = vpop.f32.mrb[0].mxu0
        %912 = vmatprep.mubr.f32.mxu0 0.0
        %913 = vmatmul.mubr.f32.gmra.mrb[0].mxu0 %v785
        %v914 = vpop.f32.mrb[0].mxu0
        %v915 = vadd.f32 0.0, %v914
        %v916 = vpop.f32.mrb[0].mxu0
        %917 = vmatprep.mubr.f32.mxu0 0.0
        %918 = vmatmul.mubr.f32.gmra.mrb[0].mxu0 %v788
        %v919 = vpop.f32.mrb[0].mxu0
        %v920 = vadd.f32 0.0, %v919
        %v921 = vpop.f32.mrb[0].mxu0
        %922 = vmatprep.mubr.f32.mxu0 0.0
        %923 = vmatmul.mubr.f32.gmra.mrb[0].mxu0 %v791
        %v924 = vpop.f32.mrb[0].mxu0
        %v925 = vadd.f32 0.0, %v924
        %v926 = vpop.f32.mrb[0].mxu0
        %927 = vmatprep.mubr.f32.mxu0 0.0
        %928 = vmatmul.mubr.f32.gmra.mrb[0].mxu0 %v794
        %v929 = vpop.f32.mrb[0].mxu0
        %v930 = vadd.f32 0.0, %v929
        %v931 = vpop.f32.mrb[0].mxu0
        %932 = vmatprep.mubr.f32.mxu0 0.0
        %933 = vmatmul.mubr.f32.gmra.mrb[0].mxu0 %v797
        %v934 = vpop.f32.mrb[0].mxu0
        %v935 = vadd.f32 0.0, %v934
        %v936 = vpop.f32.mrb[0].mxu0
        %937 = vmatprep.mubr.f32.mxu0 0.0
        %938 = vmatmul.mubr.f32.gmra.mrb[0].mxu0 %v800
        %v939 = vpop.f32.mrb[0].mxu0
        %v940 = vadd.f32 0.0, %v939
        %v941 = vpop.f32.mrb[0].mxu0
        %942 = vmatprep.mubr.f32.mxu0 0.0
        %943 = vmatmul.mubr.f32.gmra.mrb[0].mxu0 %v803
        %v944 = vpop.f32.mrb[0].mxu0
        %v945 = vadd.f32 0.0, %v944
        %v946 = vpop.f32.mrb[0].mxu0
        %947 = vmatprep.mubr.f32.mxu0 0.0
        %948 = vmatmul.mubr.f32.gmra.mrb[0].mxu0 %v806
        %v949 = vpop.f32.mrb[0].mxu0
        %v950 = vadd.f32 0.0, %v949
        %v951 = vpop.f32.mrb[0].mxu0
        %952 = vdwg.mxu0
        %953 = vst [vmem:[%s245] sm:$0xff] %v875
        %954 = vst [vmem:[%s245 + $0x8] sm:$0xff] %v880
        %955 = vst [vmem:[%s245 + $0x10] sm:$0xff] %v885
        %956 = vst [vmem:[%s245 + $0x18] sm:$0xff] %v890
        %957 = vst [vmem:[%s245 + $0x20] sm:$0xff] %v895
        %958 = vst [vmem:[%s245 + $0x28] sm:$0xff] %v900
        %959 = vst [vmem:[%s245 + $0x30] sm:$0xff] %v905
        %960 = vst [vmem:[%s245 + $0x38] sm:$0xff] %v910
        %961 = vst [vmem:[%s245 + $0x40] sm:$0xff] %v915
        %962 = vst [vmem:[%s245 + $0x48] sm:$0xff] %v920
        %963 = vst [vmem:[%s245 + $0x50] sm:$0xff] %v925
        %964 = vst [vmem:[%s245 + $0x58] sm:$0xff] %v930
        %965 = vst [vmem:[%s245 + $0x60] sm:$0xff] %v935
        %966 = vst [vmem:[%s245 + $0x68] sm:$0xff] %v940
        %967 = vst [vmem:[%s245 + $0x70] sm:$0xff] %v945
        %968 = vst [vmem:[%s245 + $0x78] sm:$0xff] %v950
        %s969 = sand.u32 %s159, 1
        %s970 = scalar_lea.sflag [#allocation3], %s969
        %s971 = sand.u32 %s159, 1
        %s972 = smul.addr %s971, 128
        %s973 = scalar_lea.vmem [#allocation2], %s972
        // Predicated region
        $region45: #{tpu_custom_call.1} parent=43 // pred_check
          %p974 = pneg %p169
        $region46: #{tpu_custom_call.1} parent=43 // pred_check_branch
          %976 = sbr.rel (%p974) target = $region48
        $region47: #{tpu_custom_call.1} parent=43 // pred_region
          %s977 = smul.u32 16, %s20
          %s979 = ssub.s32 2048, 2048
          %980 = vsyncadd %s970, %s979
          %s981 = smul.addr %s977, 128
          %s982 = scalar_lea.hbm %s6, %s981
          %s983 = sshll.u32 %s973, 4
          %s984 = int_to_ptr.vmem [resolvable:$true] %s983
          %989 = dma.vmem_to_hbm [thread:$0]  %s984, 2048, %s982, %s970, 128, 128, 8
        $region48: #{tpu_custom_call.1} parent=43 // pred_fallthru
          _
      $region44: #{tpu_custom_call.1} parent=5 // pred_fallthru
        _
      %p990 = scmp.le.s32.totalorder 2, %s15
      // Predicated region
      $region49: #{tpu_custom_call.1} parent=5 // pred_check
        %p991 = pneg %p990
      $region50: #{tpu_custom_call.1} parent=5 // pred_check_branch
        %993 = sbr.rel (%p991) target = $region52
      $region51: #{tpu_custom_call.1} parent=5 // pred_region
        %s994 = ssub.s32 %s15, 2
        // Predicated region
        $region53: #{tpu_custom_call.1} parent=51 // pred_check
          %p995 = pneg %p175
        $region54: #{tpu_custom_call.1} parent=51 // pred_check_branch
          %997 = sbr.rel (%p995) target = $region56
        $region55: #{tpu_custom_call.1} parent=51 // pred_region
          %s998 = sand.u32 %s160, 1
          %s999 = scalar_lea.sflag [#allocation3], %s998
          %s1000 = sand.u32 %s160, 1
          %s1001 = smul.addr %s1000, 128
          %s1002 = scalar_lea.vmem [#allocation2], %s1001
          %1003 = dma.done %s999, 2048
        $region56: #{tpu_custom_call.1} parent=51 // pred_fallthru
          _
      $region52: #{tpu_custom_call.1} parent=5 // pred_fallthru
        _
    $region6: #{tpu_custom_call.1} parent=1 // loop_footer
      %s19 = sadd.s32 1, %s15
    $region7: #{tpu_custom_call.1} parent=1 // loop_footer_branch
      %14 = sbr.rel target = $region3
    $region8: #{tpu_custom_call.1} parent=1 // loop_exit
      _
    %1004 = vsyncpa [#allocation3], 1
    %s1005 = scalar_lea.sflag [#allocation3], 1
    %1006 = vsyncpa %s1005, 1

</llo_original>
